<compile_context>
chip_gen: v6e
topology: v6e:2x2x1
jax: 0.10.0
libtpu: 0.0.40
codegen_flags: <defaults>
</compile_context>

<pallas_src>
import functools
import math

import jax
import jax.numpy as jnp
from jax.experimental import pallas as pl
from jax.experimental.pallas import tpu as pltpu

_LANES = 128
_SUBLANES = 8
_MAX_TILE_ROWS = 8192        # up to 4 MiB (f32) per input block per grid step
_SUB_ROWS = 1024             # in-kernel sub-slice (bounds VMEM temporaries)
_VMEM_LIMIT_BYTES = 32 * 1024 * 1024


def _specificity_kernel(pred_ref, target_ref, tn_ref, neg_ref, *,
                        logit_threshold: float, rows: int, tile_rows: int,
                        sub_rows: int, steps: int):
    """Accumulates per-chunk TN and #negatives partial sums into (8,128) blocks."""
    c = pl.program_id(0)               # chunk axis: "parallel" (one per TC on v7x)
    j = pl.program_id(1)               # step within chunk: "arbitrary" reduction
    tile_idx = c * steps + j
    tile_row0 = tile_idx * tile_rows   # int32 row index; safe for < 2**31 rows

    # Output blocks stay VMEM-resident for the whole chunk (their block index
    # only depends on c): zero them on the chunk's first step.
    @pl.when(j == 0)
    def _init():
        tn_ref[...] = jnp.zeros_like(tn_ref)
        neg_ref[...] = jnp.zeros_like(neg_ref)

    thr = jnp.float32(logit_threshold)
    n_sub = tile_rows // sub_rows      # static

    def _accumulate(start, row_mask):
        p = pred_ref[pl.ds(start, sub_rows), :].astype(jnp.float32)
        t = target_ref[pl.ds(start, sub_rows), :].astype(jnp.float32)
        neg_t = 1.0 - t
        if row_mask is not None:
            neg_t = jnp.where(row_mask, neg_t, 0.0)
        # sigmoid(pred) > threshold  <=>  pred > logit(threshold)   (monotone),
        # so "predicted negative" is  pred <= logit(threshold).
        tn_e = jnp.where(p <= thr, neg_t, 0.0)
        # (sub_rows,128) -> (sub_rows//8, 8, 128) is a layout no-op; reducing
        # the leading axis is pure VPU vreg adds.  The final cross-sublane /
        # cross-lane reduce is deferred to the tiny wrapper-side sum.
        tn_ref[...] += jnp.sum(
            tn_e.reshape(sub_rows // _SUBLANES, _SUBLANES, _LANES), axis=0)
        neg_ref[...] += jnp.sum(
            neg_t.reshape(sub_rows // _SUBLANES, _SUBLANES, _LANES), axis=0)

    def _sub_body(s, carry):
        start = pl.multiple_of(s * sub_rows, sub_rows)
        rem = rows - tile_row0 - s * sub_rows   # valid rows left in this slice

        @pl.when(rem >= sub_rows)               # fast path: full slice, no mask
        def _fast():
            _accumulate(start, None)

        @pl.when(jnp.logical_and(rem > 0, rem < sub_rows))   # last ragged slice
        def _ragged():
            row_ids = jax.lax.broadcasted_iota(jnp.int32, (sub_rows, _LANES), 0)
            _accumulate(start, row_ids < rem)

        # rem <= 0: phantom slice/tile (odd tile count) -> contributes nothing.
        return carry

    jax.lax.fori_loop(0, n_sub, _sub_body, 0)


def specificity(pred: jax.Array, target: jax.Array, threshold: float = 0.5,
                smooth: float = 1e-6, *,
                max_tile_rows: int = _MAX_TILE_ROWS) -> jax.Array:
    """Pallas implementation of the Specificity module's forward pass."""
    total = pred.size
    assert target.size == total, "pred and target must have the same number of elements"

    pred_flat = pred.reshape(-1)
    target_flat = target.reshape(-1)
    # Keep floating inputs in their native dtype (bf16 halves streamed bytes);
    # only bool/int inputs are converted so the in-kernel cast stays trivial.
    if not jnp.issubdtype(pred_flat.dtype, jnp.floating):
        pred_flat = pred_flat.astype(jnp.float32)
    if not jnp.issubdtype(target_flat.dtype, jnp.floating):
        target_flat = target_flat.astype(jnp.float32)

    # Exact logit-space threshold (sigmoid is strictly monotone).
    if threshold <= 0.0:
        logit_threshold = -float("inf")
    elif threshold >= 1.0:
        logit_threshold = float("inf")
    else:
        logit_threshold = math.log(threshold / (1.0 - threshold))
    thr32 = jnp.float32(logit_threshold)

    # The (8*128)-aligned prefix goes through the kernel as a (rows_k, 128)
    # view (pure reshape, no pad/copy); the < 1024-element remainder is a
    # cheap wrapper-side correction.
    main_elems = (total // (_SUBLANES * _LANES)) * (_SUBLANES * _LANES)
    rows_k = main_elems // _LANES

    tn = jnp.float32(0.0)
    negs = jnp.float32(0.0)

    if rows_k > 0:
        main_p = (pred_flat if main_elems == total
                  else pred_flat[:main_elems]).reshape(rows_k, _LANES)
        main_t = (target_flat if main_elems == total
                  else target_flat[:main_elems]).reshape(rows_k, _LANES)

        tile_cap = max(_SUBLANES, (int(max_tile_rows) // _SUBLANES) * _SUBLANES)
        sub_rows = min(_SUB_ROWS, tile_cap, rows_k)          # multiple of 8
        tile_rows = max(sub_rows,
                        (min(tile_cap, rows_k) // sub_rows) * sub_rows)
        num_tiles = pl.cdiv(rows_k, tile_rows)
        num_chunks = 2 if num_tiles >= 2 else 1   # v7x: one chunk per TensorCore
        steps = pl.cdiv(num_tiles, num_chunks)

        def in_map(c, j):
            # Clamp so an odd tile count's phantom step re-reads the last real
            # block (the kernel masks its contribution) instead of going OOB.
            return (jnp.minimum(c * steps + j, num_tiles - 1), 0)

        out_map = lambda c, j: (c, 0)

        kernel = functools.partial(
            _specificity_kernel, logit_threshold=logit_threshold, rows=rows_k,
            tile_rows=tile_rows, sub_rows=sub_rows, steps=steps)

        cost = pl.CostEstimate(
            flops=4 * rows_k * _LANES, transcendentals=0,
            bytes_accessed=int(main_p.size * main_p.dtype.itemsize
                               + main_t.size * main_t.dtype.itemsize
                               + 2 * num_chunks * _SUBLANES * _LANES * 4))

        tn_part, neg_part = pl.pallas_call(
            kernel,
            out_shape=(
                jax.ShapeDtypeStruct((num_chunks * _SUBLANES, _LANES), jnp.float32),
                jax.ShapeDtypeStruct((num_chunks * _SUBLANES, _LANES), jnp.float32),
            ),
            grid_spec=pltpu.PrefetchScalarGridSpec(
                num_scalar_prefetch=0,
                grid=(num_chunks, steps),
                in_specs=[
                    pl.BlockSpec((tile_rows, _LANES), in_map),
                    pl.BlockSpec((tile_rows, _LANES), in_map),
                ],
                out_specs=[
                    pl.BlockSpec((_SUBLANES, _LANES), out_map),
                    pl.BlockSpec((_SUBLANES, _LANES), out_map),
                ],
            ),
            compiler_params=pltpu.CompilerParams(
                dimension_semantics=("parallel", "arbitrary"),
                vmem_limit_bytes=_VMEM_LIMIT_BYTES),
            cost_estimate=cost,
        )(main_p, main_t)

        tn = tn + jnp.sum(tn_part)
        negs = negs + jnp.sum(neg_part)

    if main_elems < total:
        # < 1024-element unaligned tail: wrapper-side scalar correction.
        tail_p = pred_flat[main_elems:].astype(jnp.float32)
        tail_t = target_flat[main_elems:].astype(jnp.float32)
        tail_neg = 1.0 - tail_t
        tn = tn + jnp.sum(jnp.where(tail_p <= thr32, tail_neg, 0.0))
        negs = negs + jnp.sum(tail_neg)

    fp = negs - tn
    smooth_f = jnp.float32(smooth)
    return (tn + smooth_f) / (tn + fp + smooth_f)


def _reference_specificity(pred, target, threshold=0.5, smooth=1e-6):
    p = jax.nn.sigmoid(pred.astype(jnp.float32)).reshape(-1)
    pb = (p > threshold).astype(jnp.float32)
    t = target.astype(jnp.float32).reshape(-1)
    tn = jnp.sum((1.0 - pb) * (1.0 - t))
    fp = jnp.sum(pb * (1.0 - t))
    return (tn + smooth) / (tn + fp + smooth)


if __name__ == "__main__":
    key = jax.random.PRNGKey(0)
    k1, k2, k3, k4, k5, k6 = jax.random.split(key, 6)

    # 1) Lane-aligned binary-segmentation logits / targets (common fast path).
    pred = jax.random.normal(k1, (2, 1, 32, 32), dtype=jnp.float32)
    target = (jax.random.uniform(k2, (2, 1, 32, 32)) > 0.5).astype(jnp.float32)
    out = jax.block_until_ready(specificity(pred, target))
    ref = _reference_specificity(pred, target)
    assert jnp.allclose(out, ref, atol=1e-6, rtol=1e-5), (out, ref)

    # 2) Unaligned shape: exercises the wrapper-side tail correction.
    pred2 = jax.random.normal(k3, (2, 3, 17, 19), dtype=jnp.float32)
    target2 = (jax.random.uniform(k4, (2, 3, 17, 19)) > 0.5).astype(jnp.float32)
    out2 = jax.block_until_ready(specificity(pred2, target2))
    ref2 = _reference_specificity(pred2, target2)
    assert jnp.allclose(out2, ref2, atol=1e-6, rtol=1e-5), (out2, ref2)

    # 3) Multi-tile / two-chunk "parallel" path with a ragged last tile and a
    #    phantom step, plus a non-default threshold (tiny tile override so the
    #    path is exercised at small size).
    pred3 = jax.random.normal(k5, (2, 5, 16, 33), dtype=jnp.float32)
    target3 = (jax.random.uniform(k6, (2, 5, 16, 33)) > 0.5).astype(jnp.float32)
    out3 = jax.block_until_ready(
        specificity(pred3, target3, threshold=0.7, max_tile_rows=16))
    ref3 = _reference_specificity(pred3, target3, threshold=0.7)
    assert jnp.allclose(out3, ref3, atol=1e-6, rtol=1e-5), (out3, ref3)

    print("KERNEL_OK")
</pallas_src>

<mosaic_0001>
module attributes {stable_mosaic.version = 11 : i64} {
  func.func @_specificity_kernel(%arg0: i32, %arg1: i32, %arg2: memref<16x128xf32, #tpu.memory_space<vmem>>, %arg3: memref<16x128xf32, #tpu.memory_space<vmem>>, %arg4: memref<8x128xf32, #tpu.memory_space<vmem>>, %arg5: memref<8x128xf32, #tpu.memory_space<vmem>>) attributes {dimension_semantics = [#tpu.dimension_semantics<parallel>, #tpu.dimension_semantics<arbitrary>], iteration_bounds = array<i64: 1, 1>, scalar_prefetch = 0 : i64, scratch_operands = 0 : i64, tpu.core_type = #tpu.core_type<tc>, window_params = [{transform_indices = @transform_0, window_bounds = array<i64: 16, 128>}, {transform_indices = @transform_1, window_bounds = array<i64: 16, 128>}, {transform_indices = @transform_2, window_bounds = array<i64: 8, 128>}, {transform_indices = @transform_3, window_bounds = array<i64: 8, 128>}]} {
    %c1_i32 = arith.constant 1 : i32
    %0 = arith.muli %arg0, %c1_i32 : i32
    %1 = arith.addi %0, %arg1 : i32
    %c16_i32 = arith.constant 16 : i32
    %2 = arith.muli %1, %c16_i32 : i32
    %c0_i32 = arith.constant 0 : i32
    %3 = arith.cmpi eq, %arg1, %c0_i32 : i32
    %4 = arith.extui %3 : i1 to i32
    %c0_i32_0 = arith.constant 0 : i32
    %5 = arith.cmpi ne, %4, %c0_i32_0 : i32
    scf.if %5 {
      %cst_11 = arith.constant 0.000000e+00 : f32
      %19 = vector.broadcast %cst_11 : f32 to vector<8x128xf32>
      %c0 = arith.constant 0 : index
      %c0_12 = arith.constant 0 : index
      %20 = vector.load %arg4[%c0, %c0_12] : memref<8x128xf32, #tpu.memory_space<vmem>>, vector<8x128xf32>
      tpu.vector_store %arg4[%c0, %c0_12], %19 {strides = array<i32>} : memref<8x128xf32, #tpu.memory_space<vmem>>, vector<8x128xf32>,
      %cst_13 = arith.constant 0.000000e+00 : f32
      %21 = vector.broadcast %cst_13 : f32 to vector<8x128xf32>
      %c0_14 = arith.constant 0 : index
      %c0_15 = arith.constant 0 : index
      %22 = vector.load %arg5[%c0_14, %c0_15] : memref<8x128xf32, #tpu.memory_space<vmem>>, vector<8x128xf32>
      tpu.vector_store %arg5[%c0_14, %c0_15], %21 {strides = array<i32>} : memref<8x128xf32, #tpu.memory_space<vmem>>, vector<8x128xf32>,
    } else {
    }
    %cst = arith.constant 0.000000e+00 : f32
    %c0_i32_1 = arith.constant 0 : i32
    %c16_i32_2 = arith.constant 16 : i32
    %6 = arith.muli %c0_i32_1, %c16_i32_2 : i32
    %7 = tpu.assume_multiple %6, 16 : i32
    %c16_i32_3 = arith.constant 16 : i32
    %8 = arith.subi %c16_i32_3, %2 : i32
    %c16_i32_4 = arith.constant 16 : i32
    %9 = arith.muli %c0_i32_1, %c16_i32_4 : i32
    %10 = arith.subi %8, %9 : i32
    %c16_i32_5 = arith.constant 16 : i32
    %11 = arith.cmpi sge, %10, %c16_i32_5 : i32
    %12 = arith.extui %11 : i1 to i32
    %c0_i32_6 = arith.constant 0 : i32
    %13 = arith.cmpi ne, %12, %c0_i32_6 : i32
    scf.if %13 {
      %19 = arith.index_cast %7 : i32 to index
      %c0 = arith.constant 0 : index
      %20 = vector.load %arg2[%19, %c0] : memref<16x128xf32, #tpu.memory_space<vmem>>, vector<16x128xf32>
      %21 = arith.index_cast %7 : i32 to index
      %c0_11 = arith.constant 0 : index
      %22 = vector.load %arg3[%21, %c0_11] : memref<16x128xf32, #tpu.memory_space<vmem>>, vector<16x128xf32>
      %cst_12 = arith.constant 1.000000e+00 : f32
      %23 = vector.broadcast %cst_12 : f32 to vector<16x128xf32>
      %24 = arith.subf %23, %22 : vector<16x128xf32>
      %25 = vector.broadcast %cst : f32 to vector<16x128xf32>
      %26 = arith.cmpf ole, %20, %25 : vector<16x128xf32>
      %cst_13 = arith.constant 0.000000e+00 : f32
      %27 = vector.broadcast %cst_13 : f32 to vector<16x128xf32>
      %28 = arith.select %26, %24, %27 : vector<16x128xi1>, vector<16x128xf32>
      %c0_14 = arith.constant 0 : index
      %c0_15 = arith.constant 0 : index
      %29 = vector.load %arg4[%c0_14, %c0_15] : memref<8x128xf32, #tpu.memory_space<vmem>>, vector<8x128xf32>
      %30 = vector.shape_cast %28 : vector<16x128xf32> to vector<2x8x128xf32>
      %cst_16 = arith.constant dense<0.000000e+00> : vector<8x128xf32>
      %31 = vector.multi_reduction <add>, %30, %cst_16 [0] : vector<2x8x128xf32> to vector<8x128xf32>
      %32 = arith.addf %29, %31 : vector<8x128xf32>
      %c0_17 = arith.constant 0 : index
      %c0_18 = arith.constant 0 : index
      %33 = vector.load %arg4[%c0_17, %c0_18] : memref<8x128xf32, #tpu.memory_space<vmem>>, vector<8x128xf32>
      tpu.vector_store %arg4[%c0_17, %c0_18], %32 {strides = array<i32>} : memref<8x128xf32, #tpu.memory_space<vmem>>, vector<8x128xf32>,
      %c0_19 = arith.constant 0 : index
      %c0_20 = arith.constant 0 : index
      %34 = vector.load %arg5[%c0_19, %c0_20] : memref<8x128xf32, #tpu.memory_space<vmem>>, vector<8x128xf32>
      %35 = vector.shape_cast %24 : vector<16x128xf32> to vector<2x8x128xf32>
      %cst_21 = arith.constant dense<0.000000e+00> : vector<8x128xf32>
      %36 = vector.multi_reduction <add>, %35, %cst_21 [0] : vector<2x8x128xf32> to vector<8x128xf32>
      %37 = arith.addf %34, %36 : vector<8x128xf32>
      %c0_22 = arith.constant 0 : index
      %c0_23 = arith.constant 0 : index
      %38 = vector.load %arg5[%c0_22, %c0_23] : memref<8x128xf32, #tpu.memory_space<vmem>>, vector<8x128xf32>
      tpu.vector_store %arg5[%c0_22, %c0_23], %37 {strides = array<i32>} : memref<8x128xf32, #tpu.memory_space<vmem>>, vector<8x128xf32>,
    } else {
    }
    %c0_i32_7 = arith.constant 0 : i32
    %14 = arith.cmpi sgt, %10, %c0_i32_7 : i32
    %c16_i32_8 = arith.constant 16 : i32
    %15 = arith.cmpi slt, %10, %c16_i32_8 : i32
    %16 = arith.andi %14, %15 : i1
    %17 = arith.extui %16 : i1 to i32
    %c0_i32_9 = arith.constant 0 : i32
    %18 = arith.cmpi ne, %17, %c0_i32_9 : i32
    scf.if %18 {
      %19 = tpu.iota {dimensions = array<i32: 0>} : vector<16x128xi32>
      %20 = vector.broadcast %10 : i32 to vector<16x128xi32>
      %21 = arith.cmpi slt, %19, %20 : vector<16x128xi32>
      %22 = arith.index_cast %7 : i32 to index
      %c0 = arith.constant 0 : index
      %23 = vector.load %arg2[%22, %c0] : memref<16x128xf32, #tpu.memory_space<vmem>>, vector<16x128xf32>
      %24 = arith.index_cast %7 : i32 to index
      %c0_11 = arith.constant 0 : index
      %25 = vector.load %arg3[%24, %c0_11] : memref<16x128xf32, #tpu.memory_space<vmem>>, vector<16x128xf32>
      %cst_12 = arith.constant 1.000000e+00 : f32
      %26 = vector.broadcast %cst_12 : f32 to vector<16x128xf32>
      %27 = arith.subf %26, %25 : vector<16x128xf32>
      %cst_13 = arith.constant 0.000000e+00 : f32
      %28 = vector.broadcast %cst_13 : f32 to vector<16x128xf32>
      %29 = arith.select %21, %27, %28 : vector<16x128xi1>, vector<16x128xf32>
      %30 = vector.broadcast %cst : f32 to vector<16x128xf32>
      %31 = arith.cmpf ole, %23, %30 : vector<16x128xf32>
      %cst_14 = arith.constant 0.000000e+00 : f32
      %32 = vector.broadcast %cst_14 : f32 to vector<16x128xf32>
      %33 = arith.select %31, %29, %32 : vector<16x128xi1>, vector<16x128xf32>
      %c0_15 = arith.constant 0 : index
      %c0_16 = arith.constant 0 : index
      %34 = vector.load %arg4[%c0_15, %c0_16] : memref<8x128xf32, #tpu.memory_space<vmem>>, vector<8x128xf32>
      %35 = vector.shape_cast %33 : vector<16x128xf32> to vector<2x8x128xf32>
      %cst_17 = arith.constant dense<0.000000e+00> : vector<8x128xf32>
      %36 = vector.multi_reduction <add>, %35, %cst_17 [0] : vector<2x8x128xf32> to vector<8x128xf32>
      %37 = arith.addf %34, %36 : vector<8x128xf32>
      %c0_18 = arith.constant 0 : index
      %c0_19 = arith.constant 0 : index
      %38 = vector.load %arg4[%c0_18, %c0_19] : memref<8x128xf32, #tpu.memory_space<vmem>>, vector<8x128xf32>
      tpu.vector_store %arg4[%c0_18, %c0_19], %37 {strides = array<i32>} : memref<8x128xf32, #tpu.memory_space<vmem>>, vector<8x128xf32>,
      %c0_20 = arith.constant 0 : index
      %c0_21 = arith.constant 0 : index
      %39 = vector.load %arg5[%c0_20, %c0_21] : memref<8x128xf32, #tpu.memory_space<vmem>>, vector<8x128xf32>
      %40 = vector.shape_cast %29 : vector<16x128xf32> to vector<2x8x128xf32>
      %cst_22 = arith.constant dense<0.000000e+00> : vector<8x128xf32>
      %41 = vector.multi_reduction <add>, %40, %cst_22 [0] : vector<2x8x128xf32> to vector<8x128xf32>
      %42 = arith.addf %39, %41 : vector<8x128xf32>
      %c0_23 = arith.constant 0 : index
      %c0_24 = arith.constant 0 : index
      %43 = vector.load %arg5[%c0_23, %c0_24] : memref<8x128xf32, #tpu.memory_space<vmem>>, vector<8x128xf32>
      tpu.vector_store %arg5[%c0_23, %c0_24], %42 {strides = array<i32>} : memref<8x128xf32, #tpu.memory_space<vmem>>, vector<8x128xf32>,
    } else {
    }
    %c1_i32_10 = arith.constant 1 : i32
    return
  }
  func.func @transform_0(%arg0: i32, %arg1: i32) -> (i32, i32) {
    %c1_i32 = arith.constant 1 : i32
    %0 = arith.muli %arg0, %c1_i32 : i32
    %1 = arith.addi %0, %arg1 : i32
    %c0_i32 = arith.constant 0 : i32
    %2 = arith.minsi %1, %c0_i32 : i32
    %c0_i32_0 = arith.constant 0 : i32
    %c0_i32_1 = arith.constant 0 : i32
    return %2, %c0_i32_0 : i32, i32
  }
  func.func @transform_1(%arg0: i32, %arg1: i32) -> (i32, i32) {
    %c1_i32 = arith.constant 1 : i32
    %0 = arith.muli %arg0, %c1_i32 : i32
    %1 = arith.addi %0, %arg1 : i32
    %c0_i32 = arith.constant 0 : i32
    %2 = arith.minsi %1, %c0_i32 : i32
    %c0_i32_0 = arith.constant 0 : i32
    %c0_i32_1 = arith.constant 0 : i32
    return %2, %c0_i32_0 : i32, i32
  }
  func.func @transform_2(%arg0: i32, %arg1: i32) -> (i32, i32) {
    %c0_i32 = arith.constant 0 : i32
    %c0_i32_0 = arith.constant 0 : i32
    return %arg0, %c0_i32 : i32, i32
  }
  func.func @transform_3(%arg0: i32, %arg1: i32) -> (i32, i32) {
    %c0_i32 = arith.constant 0 : i32
    %c0_i32_0 = arith.constant 0 : i32
    return %arg0, %c0_i32 : i32, i32
  }
}

</mosaic_0001>

<llo_original>
// kernel: tpu_custom_call.1
$region0: #{tpu_custom_call.1}
  #allocation0 [shape = 'u32[]', space=smem, size = 0x4, offset = 0x4, fixed_abs, tag = 'smem constant byte address 0x4 - core index']
  #allocation1 [shape = 'u32[144,128]{1,0:T(1,128)}', space=vmem, size = 0x12000, scoped, tag = 'internal scratch']
  %s0 = inlined_call_operand.hbm [shape: f32[16,128], index: 0, kind: input, shape index: {}]
  %s1 = inlined_call_operand.hbm [shape: f32[16,128], index: 1, kind: input, shape index: {}]
  %s2 = inlined_call_operand.hbm [shape: f32[8,128], index: 2, kind: output, shape index: {0}]
  %s3 = inlined_call_operand.hbm [shape: f32[8,128], index: 3, kind: output, shape index: {1}]
  %4 = xla_tuple %s2, %s3
  %s5 = sld [smem:[#allocation0]]
  $region46: #{tpu_custom_call.1} parent=0
    _
  %s7 = ssub.s32 1, %s5
  %s8 = scalar_select 0, %s7, %s5
  $region1: #{tpu_custom_call.1} parent=0
    #allocation2 [shape = 'u8[8192]{0}', space=vmem, size = 0x2000, scoped, tag = 'input window, operand 0, single buffered']
    #allocation3 [shape = 's32[1]{0}', space=sflag, size = 0x4, scoped, tag = 'scoped memory for tpu_custom_call.1']
    #allocation4 [shape = 's32[1]{0}', space=sflag, size = 0x4, scoped, tag = 'scoped memory for tpu_custom_call.1']
    #allocation5 [shape = 'u8[8192]{0}', space=vmem, size = 0x2000, scoped, tag = 'input window, operand 1, single buffered']
    #allocation6 [shape = 's32[1]{0}', space=sflag, size = 0x4, scoped, tag = 'scoped memory for tpu_custom_call.1']
    #allocation7 [shape = 'u8[4096]{0}', space=vmem, size = 0x1000, scoped, tag = 'output window, operand 0, single buffered']
    #allocation8 [shape = 'u8[4096]{0}', space=vmem, size = 0x1000, scoped, tag = 'output window, operand 1, single buffered']
    #allocation9 [shape = 's32[1]{0}', space=sflag, size = 0x4, scoped, tag = 'scoped memory for tpu_custom_call.1']
    %9 = vsyncpa [#allocation3], 0
    %10 = vsyncpa [#allocation6], 0
    %11 = vsyncpa [#allocation4], 0
    %12 = vsyncpa [#allocation9], 0
    // Predicated region
    $region2: #{tpu_custom_call.1} parent=1 // pred_check
      _
    $region3: #{tpu_custom_call.1} parent=1 // pred_check_branch
      %14 = sbr.rel (0) target = $region5
    $region4: #{tpu_custom_call.1} parent=1 // pred_region
      %s15 = sadd.s32 0, 0
      %p16 = scmp.lt.s32.totalorder %s15, 0
      %s17 = scalar_select %p16, %s15, 0
      %s18 = smul.u32 2, %s17
      %s20 = ssub.s32 256, 256
      %21 = vsyncadd [#allocation3], %s20
      %s22 = smul.addr %s18, 128
      %s23 = scalar_lea.hbm %s0, %s22
      %s24 = sshll.u32 [#allocation2], 4
      %s25 = int_to_ptr.vmem [resolvable:$true] %s24
      %30 = dma.hbm_to_vmem [thread:$0]  %s23, 256, %s25, [#allocation3], 128, 128, 8
    $region5: #{tpu_custom_call.1} parent=1 // pred_fallthru
      _
    // Predicated region
    $region6: #{tpu_custom_call.1} parent=1 // pred_check
      _
    $region7: #{tpu_custom_call.1} parent=1 // pred_check_branch
      %32 = sbr.rel (0) target = $region9
    $region8: #{tpu_custom_call.1} parent=1 // pred_region
      %s33 = sadd.s32 0, 0
      %p34 = scmp.lt.s32.totalorder %s33, 0
      %s35 = scalar_select %p34, %s33, 0
      %s36 = smul.u32 2, %s35
      %s38 = ssub.s32 256, 256
      %39 = vsyncadd [#allocation6], %s38
      %s40 = smul.addr %s36, 128
      %s41 = scalar_lea.hbm %s1, %s40
      %s42 = sshll.u32 [#allocation5], 4
      %s43 = int_to_ptr.vmem [resolvable:$true] %s42
      %48 = dma.hbm_to_vmem [thread:$0]  %s41, 256, %s43, [#allocation6], 128, 128, 8
    $region9: #{tpu_custom_call.1} parent=1 // pred_fallthru
      _
    // Predicated region
    $region10: #{tpu_custom_call.1} parent=1 // pred_check
      _
    $region11: #{tpu_custom_call.1} parent=1 // pred_check_branch
      %50 = sbr.rel (0) target = $region13
    $region12: #{tpu_custom_call.1} parent=1 // pred_region
      %51 = dma.done [#allocation3], 256
    $region13: #{tpu_custom_call.1} parent=1 // pred_fallthru
      _
    // Predicated region
    $region14: #{tpu_custom_call.1} parent=1 // pred_check
      _
    $region15: #{tpu_custom_call.1} parent=1 // pred_check_branch
      %53 = sbr.rel (0) target = $region17
    $region16: #{tpu_custom_call.1} parent=1 // pred_region
      %54 = dma.done [#allocation6], 256
    $region17: #{tpu_custom_call.1} parent=1 // pred_fallthru
      _
    %s55 = sadd.s32 0, 0
    %p56 = scmp.lt.s32.totalorder %s55, 0
    %s57 = scalar_select %p56, %s55, 0
    %s58 = smul.u32 2, %s57
    %s59 = sadd.s32 0, 0
    %p60 = scmp.lt.s32.totalorder %s59, 0
    %s61 = scalar_select %p60, %s59, 0
    %s62 = smul.u32 2, %s61
    %s63 = sadd.s32 0, 0
    %s64 = smul.u32 %s63, 16
    %p65 = scmp.eq.s32.totalorder 0, 0
    // Predicated region
    $region18: #{tpu_custom_call.1} parent=1 // pred_check
      %p66 = pneg %p65
    $region19: #{tpu_custom_call.1} parent=1 // pred_check_branch
      %68 = sbr.rel (%p66) target = $region21
    $region20: #{tpu_custom_call.1} parent=1 // pred_region
      %69 = vst [vmem:[#allocation7] sm:$0xff] 0.0
      %70 = vst [vmem:[#allocation8] sm:$0xff] 0.0
    $region21: #{tpu_custom_call.1} parent=1 // pred_fallthru
      _
    %s71 = ssub.s32 16, %s64
    %p72 = scmp.ge.s32.totalorder %s71, 16
    // Predicated region
    $region22: #{tpu_custom_call.1} parent=1 // pred_check
      %p73 = pneg %p72
    $region23: #{tpu_custom_call.1} parent=1 // pred_check_branch
      %75 = sbr.rel (%p73) target = $region25
    $region24: #{tpu_custom_call.1} parent=1 // pred_region
      %v76 = vld [vmem:[#allocation2] sm:$0xff]
      %v77 = vld [vmem:[#allocation2 + $0x8] sm:$0xff]
      %v78 = vld [vmem:[#allocation5] sm:$0xff]
      %v79 = vld [vmem:[#allocation5 + $0x8] sm:$0xff]
      %v80 = vsub.f32 1.0, %v78
      %v81 = vsub.f32 1.0, %v79
      %vm82 = vcmp.le.f32.partialorder %v76, 0.0
      %vm83 = vcmp.le.f32.partialorder %v77, 0.0
      %v84 = vsel %vm82, %v80, 0.0
      %v85 = vsel %vm83, %v81, 0.0
      %v86 = vld [vmem:[#allocation7] sm:$0xff]
      %v87 = vadd.f32 %v84, %v85
      %v88 = vadd.f32 %v86, %v87
      %89 = vst [vmem:[#allocation7] sm:$0xff] %v88
      %v90 = vld [vmem:[#allocation8] sm:$0xff]
      %v91 = vadd.f32 %v80, %v81
      %v92 = vadd.f32 %v90, %v91
      %93 = vst [vmem:[#allocation8] sm:$0xff] %v92
    $region25: #{tpu_custom_call.1} parent=1 // pred_fallthru
      _
    %p94 = scmp.gt.s32.totalorder %s71, 0
    %p95 = scmp.lt.s32.totalorder %s71, 16
    %p96 = pnand %p94, %p95
    %p97 = pneg %p96
    // Predicated region
    $region26: #{tpu_custom_call.1} parent=1 // pred_check
      _
    $region27: #{tpu_custom_call.1} parent=1 // pred_check_branch
      %99 = sbr.rel (%p96) target = $region29
    $region28: #{tpu_custom_call.1} parent=1 // pred_region
      %v100 = vlaneseq
      %v101 = vshrl.u32 %v100, 7
      %v102 = vadd.s32 %v101, 8
      %v103 = vstv %s71
      %vm104 = vcmp.lt.s32.totalorder %v101, %v103
      %vm105 = vcmp.lt.s32.totalorder %v102, %v103
      %v106 = vld [vmem:[#allocation2] sm:$0xff]
      %v107 = vld [vmem:[#allocation2 + $0x8] sm:$0xff]
      %v108 = vld [vmem:[#allocation5] sm:$0xff]
      %v109 = vld [vmem:[#allocation5 + $0x8] sm:$0xff]
      %v110 = vsub.f32 1.0, %v108
      %v111 = vsub.f32 1.0, %v109
      %v112 = vsel %vm104, %v110, 0.0
      %v113 = vsel %vm105, %v111, 0.0
      %vm114 = vcmp.le.f32.partialorder %v106, 0.0
      %vm115 = vcmp.le.f32.partialorder %v107, 0.0
      %v116 = vsel %vm114, %v112, 0.0
      %v117 = vsel %vm115, %v113, 0.0
      %v118 = vld [vmem:[#allocation7] sm:$0xff]
      %v119 = vadd.f32 %v116, %v117
      %v120 = vadd.f32 %v118, %v119
      %121 = vst [vmem:[#allocation7] sm:$0xff] %v120
      %v122 = vld [vmem:[#allocation8] sm:$0xff]
      %v123 = vadd.f32 %v112, %v113
      %v124 = vadd.f32 %v122, %v123
      %125 = vst [vmem:[#allocation8] sm:$0xff] %v124
    $region29: #{tpu_custom_call.1} parent=1 // pred_fallthru
      _
    // Predicated region
    $region30: #{tpu_custom_call.1} parent=1 // pred_check
      _
    $region31: #{tpu_custom_call.1} parent=1 // pred_check_branch
      %127 = sbr.rel (0) target = $region33
    $region32: #{tpu_custom_call.1} parent=1 // pred_region
      %s129 = ssub.s32 128, 128
      %130 = vsyncadd [#allocation4], %s129
      %s132 = sshll.u32 [#allocation7], 4
      %s133 = int_to_ptr.vmem [resolvable:$true] %s132
      %135 = dma.vmem_to_hbm [thread:$0]  %s133, 128, %s2, [#allocation4]
    $region33: #{tpu_custom_call.1} parent=1 // pred_fallthru
      _
    // Predicated region
    $region34: #{tpu_custom_call.1} parent=1 // pred_check
      _
    $region35: #{tpu_custom_call.1} parent=1 // pred_check_branch
      %137 = sbr.rel (0) target = $region37
    $region36: #{tpu_custom_call.1} parent=1 // pred_region
      %s139 = ssub.s32 128, 128
      %140 = vsyncadd [#allocation9], %s139
      %s142 = sshll.u32 [#allocation8], 4
      %s143 = int_to_ptr.vmem [resolvable:$true] %s142
      %145 = dma.vmem_to_hbm [thread:$0]  %s143, 128, %s3, [#allocation9]
    $region37: #{tpu_custom_call.1} parent=1 // pred_fallthru
      _
    // Predicated region
    $region38: #{tpu_custom_call.1} parent=1 // pred_check
      _
    $region39: #{tpu_custom_call.1} parent=1 // pred_check_branch
      %147 = sbr.rel (0) target = $region41
    $region40: #{tpu_custom_call.1} parent=1 // pred_region
      %148 = dma.done [#allocation4], 128
    $region41: #{tpu_custom_call.1} parent=1 // pred_fallthru
      _
    // Predicated region
    $region42: #{tpu_custom_call.1} parent=1 // pred_check
      _
    $region43: #{tpu_custom_call.1} parent=1 // pred_check_branch
      %150 = sbr.rel (0) target = $region45
    $region44: #{tpu_custom_call.1} parent=1 // pred_region
      %151 = dma.done [#allocation9], 128
    $region45: #{tpu_custom_call.1} parent=1 // pred_fallthru
      _
    %152 = vsyncpa [#allocation3], 1
    %153 = vsyncpa [#allocation6], 1
    %154 = vsyncpa [#allocation4], 1
    %155 = vsyncpa [#allocation9], 1

</llo_original>
